<compile_context>
chip_gen: v7x
topology: tpu7x:2x2x1
jax: 0.10.0
libtpu: 0.0.40
codegen_flags: <defaults>
</compile_context>

<pallas_src>
import functools
import math

import jax
import jax.numpy as jnp
from jax import lax
from jax.experimental import pallas as pl
from jax.experimental.pallas import tpu as pltpu


def _pick_h_tile(bh, d, lane_width=128, max_heads=8):
    """Heads per grid step: amortize grid overhead, keep >=2 grid steps for
    megacore sharding, and prefer a lane-dense (multiple-of-128) fused output."""
    candidates = [
        t for t in range(1, bh + 1)
        if bh % t == 0 and t <= max_heads and (bh // t >= 2 or (bh == 1 and t == 1))
    ]
    if not candidates:
        candidates = [1]
    lane_dense = [t for t in candidates if (t * d) % lane_width == 0]
    return max(lane_dense) if lane_dense else max(candidates)


def _attn_kernel(*refs, h_tile, use_scale, scale, mask_mode, mxu_dtype):
    if mask_mode == "none":
        q_ref, k_ref, v_ref, o_ref = refs
        b_ref = None
    else:
        q_ref, k_ref, v_ref, b_ref, o_ref = refs

    outs = []
    for h in range(h_tile):            # statically unrolled, h_tile is small
        q_h = q_ref[0, h]              # (Lq, D), input dtype (f32 here)
        k_h = k_ref[0, h]              # (Lk, D), MXU operand dtype
        v_h = v_ref[0, h]              # (Lk, D), MXU operand dtype

        # Fold the 1/sqrt(D) scale into Q (Lq*D muls instead of Lq*Lk).
        q_mm = (q_h * scale) if use_scale else q_h

        # score = q @ k^T -- contract the last dims directly (no K transpose).
        s = lax.dot_general(
            q_mm.astype(mxu_dtype), k_h,
            dimension_numbers=(((1,), (1,)), ((), ())),
            preferred_element_type=jnp.float32)          # (Lq, Lk) f32

        if mask_mode == "shared":
            s = s + b_ref[0]           # precomputed -1e9*(1-mask), VMEM-resident
        elif mask_mode == "per_head":
            s = s + b_ref[0, h]

        # Numerically stable softmax in f32; normalization via EUP reciprocal.
        m = jnp.max(s, axis=-1, keepdims=True)
        p = jnp.exp(s - m)
        denom = jnp.sum(p, axis=-1, keepdims=True)
        p = p * pl.reciprocal(denom, approx=True)

        # dropout(p=0.0) is the identity.  out = p @ v + q (f32 accumulation).
        o_h = jnp.dot(p.astype(mxu_dtype), v_h,
                      preferred_element_type=jnp.float32) + q_h
        outs.append(o_h)

    # Lane-dense store: one (Lq, h_tile*D) slab instead of h_tile masked stores.
    slab = outs[0] if h_tile == 1 else jnp.concatenate(outs, axis=-1)
    o_ref[0] = slab.astype(o_ref.dtype)


def dot_product_attention(query, key_input, value, mask=None, *,
                          use_scale=True, mxu_dtype=jnp.bfloat16, h_tile=None):
    """Pallas TPU implementation of DotProductAttention.forward."""
    B, H, Lq, D = query.shape
    Lk = key_input.shape[2]
    BH = B * H
    if h_tile is None:
        h_tile = _pick_h_tile(BH, D)
    assert BH % h_tile == 0
    G = BH // h_tile

    out_dtype = query.dtype
    # No wrapper-level f32 up-cast of q (keeps the residual exact and avoids an
    # extra HBM round-trip); k/v are stored in the MXU operand dtype, which
    # halves their HBM/DMA traffic when mxu_dtype=bfloat16.
    q = query.reshape(G, h_tile, Lq, D)
    k = key_input.reshape(G, h_tile, Lk, D).astype(mxu_dtype)
    v = value.reshape(G, h_tile, Lk, D).astype(mxu_dtype)

    inputs = [q, k, v]
    in_specs = [
        pl.BlockSpec((1, h_tile, Lq, D), lambda i: (i, 0, 0, 0)),
        pl.BlockSpec((1, h_tile, Lk, D), lambda i: (i, 0, 0, 0)),
        pl.BlockSpec((1, h_tile, Lk, D), lambda i: (i, 0, 0, 0)),
    ]

    mask_mode = "none"
    bias_bytes = 0
    if mask is not None:
        m = jnp.asarray(mask, jnp.float32)
        if m.ndim == 2:
            m = m[None, None]
        assert m.ndim == 4, "mask must be 2D or 4D (broadcastable to (B,H,Lq,Lk))"
        if m.shape[0] == 1 and m.shape[1] == 1:
            # Shared mask: a single (Lq, Lk) additive-bias block with a constant
            # index_map -> fetched once, kept VMEM-resident across all grid steps.
            bias = (-1e9 * (1.0 - jnp.broadcast_to(m, (1, 1, Lq, Lk)))).reshape(1, Lq, Lk)
            inputs.append(bias)
            in_specs.append(pl.BlockSpec((1, Lq, Lk), lambda i: (0, 0, 0)))
            mask_mode = "shared"
            bias_bytes = Lq * Lk * 4
        else:
            bias = -1e9 * (1.0 - jnp.broadcast_to(m, (B, H, Lq, Lk)))
            bias = bias.reshape(G, h_tile, Lq, Lk)
            inputs.append(bias)
            in_specs.append(pl.BlockSpec((1, h_tile, Lq, Lk), lambda i: (i, 0, 0, 0)))
            mask_mode = "per_head"
            bias_bytes = h_tile * Lq * Lk * 4

    kernel = functools.partial(
        _attn_kernel, h_tile=h_tile, use_scale=use_scale,
        scale=1.0 / math.sqrt(float(D)), mask_mode=mask_mode, mxu_dtype=mxu_dtype)

    # Rough per-step VMEM footprint (the pipeline double-buffers each operand);
    # set an explicit limit with headroom, clamped below v7x's 64 MiB physical.
    block_bytes = (h_tile * Lq * D * jnp.dtype(query.dtype).itemsize
                   + 2 * h_tile * Lk * D * jnp.dtype(mxu_dtype).itemsize
                   + bias_bytes
                   + Lq * h_tile * D * jnp.dtype(out_dtype).itemsize)
    vmem_limit = int(min(max(4 * block_bytes + (2 << 20), 16 << 20), 48 << 20))

    out = pl.pallas_call(
        kernel,
        out_shape=jax.ShapeDtypeStruct((G, Lq, h_tile * D), out_dtype),
        grid_spec=pltpu.PrefetchScalarGridSpec(
            num_scalar_prefetch=0,
            grid=(G,),
            in_specs=in_specs,
            out_specs=pl.BlockSpec((1, Lq, h_tile * D), lambda i: (i, 0, 0)),
        ),
        compiler_params=pltpu.CompilerParams(
            dimension_semantics=("parallel",),
            vmem_limit_bytes=vmem_limit,
        ),
    )(*inputs)

    # Un-fuse the lane-dense slab back to (B, H, Lq, D) (layout plumbing only).
    out = out.reshape(G, Lq, h_tile, D)
    out = jnp.transpose(out, (0, 2, 1, 3)).reshape(B, H, Lq, D)
    return out


def _reference(query, key_input, value, mask=None, use_scale=True):
    """Pure-JAX reference mirroring the PyTorch forward (pos-emb disabled, p=0)."""
    score = jnp.einsum("bhqd,bhkd->bhqk", query, key_input)
    if use_scale:
        score = score / jnp.sqrt(jnp.float32(query.shape[-1]))
    if mask is not None:
        score = score - 1e9 * (1.0 - mask.astype(jnp.float32))
    score = jax.nn.softmax(score, axis=-1)
    return jnp.einsum("bhqk,bhkd->bhqd", score, value) + query


if __name__ == "__main__":
    # Small shapes consistent with the module's attention path.
    B, H, Lq, Lk, D = 2, 4, 16, 16, 32

    key = jax.random.PRNGKey(0)
    kq, kk, kv = jax.random.split(key, 3)
    query = jax.random.normal(kq, (B, H, Lq, D), dtype=jnp.float32)
    key_input = jax.random.normal(kk, (B, H, Lk, D), dtype=jnp.float32)
    value = jax.random.normal(kv, (B, H, Lk, D), dtype=jnp.float32)

    # Causal mask (broadcast over batch and heads), 1.0 = attend, 0.0 = masked.
    mask = jnp.tril(jnp.ones((Lq, Lk), jnp.float32))[None, None, :, :]

    ref = _reference(query, key_input, value, mask=mask, use_scale=True)

    # f32 MXU-operand path: tight check against the pure-JAX f32 reference
    # (only the approx EUP reciprocal differs).
    out_f32 = dot_product_attention(query, key_input, value, mask=mask,
                                    use_scale=True, mxu_dtype=jnp.float32)
    out_f32 = jax.block_until_ready(out_f32)
    assert out_f32.shape == (B, H, Lq, D)
    assert jnp.allclose(out_f32, ref, atol=1e-2, rtol=1e-2), "f32 path mismatch"

    # bf16 MXU-operand fast path (f32 accumulation / softmax / residual):
    # tolerance reflects bfloat16 rounding of the matmul operands.
    out_bf16 = dot_product_attention(query, key_input, value, mask=mask,
                                     use_scale=True, mxu_dtype=jnp.bfloat16)
    out_bf16 = jax.block_until_ready(out_bf16)
    assert out_bf16.shape == (B, H, Lq, D)
    assert jnp.allclose(out_bf16, ref, atol=7e-2, rtol=5e-2), "bf16 path mismatch"

    print("KERNEL_OK")
</pallas_src>

<mosaic_0001>
module attributes {stable_mosaic.version = 11 : i64} {
  func.func @_attn_kernel(%arg0: i32, %arg1: memref<1x4x16x32xf32, #tpu.memory_space<vmem>>, %arg2: memref<1x4x16x32xf32, #tpu.memory_space<vmem>>, %arg3: memref<1x4x16x32xf32, #tpu.memory_space<vmem>>, %arg4: memref<1x16x16xf32, #tpu.memory_space<vmem>>, %arg5: memref<1x16x128xf32, #tpu.memory_space<vmem>>) attributes {dimension_semantics = [#tpu.dimension_semantics<parallel>], iteration_bounds = array<i64: 2>, scalar_prefetch = 0 : i64, scratch_operands = 0 : i64, tpu.core_type = #tpu.core_type<tc>, window_params = [{transform_indices = @transform_0, window_bounds = array<i64: 1, 4, 16, 32>}, {transform_indices = @transform_1, window_bounds = array<i64: 1, 4, 16, 32>}, {transform_indices = @transform_2, window_bounds = array<i64: 1, 4, 16, 32>}, {pipeline_mode = #tpu.pipeline_mode<synchronous>, transform_indices = @transform_3, window_bounds = array<i64: 1, 16, 16>}, {transform_indices = @transform_4, window_bounds = array<i64: 1, 16, 128>}]} {
    %c0 = arith.constant 0 : index
    %c0_0 = arith.constant 0 : index
    %c0_1 = arith.constant 0 : index
    %c0_2 = arith.constant 0 : index
    %0 = vector.load %arg1[%c0, %c0_0, %c0_1, %c0_2] : memref<1x4x16x32xf32, #tpu.memory_space<vmem>>, vector<1x1x16x32xf32>
    %1 = vector.shape_cast %0 : vector<1x1x16x32xf32> to vector<16x32xf32>
    %c0_3 = arith.constant 0 : index
    %c0_4 = arith.constant 0 : index
    %c0_5 = arith.constant 0 : index
    %c0_6 = arith.constant 0 : index
    %2 = vector.load %arg2[%c0_3, %c0_4, %c0_5, %c0_6] : memref<1x4x16x32xf32, #tpu.memory_space<vmem>>, vector<1x1x16x32xf32>
    %3 = vector.shape_cast %2 : vector<1x1x16x32xf32> to vector<16x32xf32>
    %c0_7 = arith.constant 0 : index
    %c0_8 = arith.constant 0 : index
    %c0_9 = arith.constant 0 : index
    %c0_10 = arith.constant 0 : index
    %4 = vector.load %arg3[%c0_7, %c0_8, %c0_9, %c0_10] : memref<1x4x16x32xf32, #tpu.memory_space<vmem>>, vector<1x1x16x32xf32>
    %5 = vector.shape_cast %4 : vector<1x1x16x32xf32> to vector<16x32xf32>
    %cst = arith.constant 0.176776692 : f32
    %6 = vector.broadcast %cst : f32 to vector<16x32xf32>
    %7 = arith.mulf %1, %6 : vector<16x32xf32>
    %cst_11 = arith.constant dense<0.000000e+00> : vector<16x16xf32>
    %8 = tpu.matmul %7, %3, %cst_11 {dimension_numbers = #tpu.dot_dimension_numbers<[1], [1], [0], [0], [0, 0, 1, 0], [], []>} : vector<16x32xf32>, vector<16x32xf32>, vector<16x16xf32> -> vector<16x16xf32>
    %c0_12 = arith.constant 0 : index
    %c0_13 = arith.constant 0 : index
    %c0_14 = arith.constant 0 : index
    %9 = vector.load %arg4[%c0_12, %c0_13, %c0_14] : memref<1x16x16xf32, #tpu.memory_space<vmem>>, vector<1x16x16xf32>
    %10 = vector.shape_cast %9 : vector<1x16x16xf32> to vector<16x16xf32>
    %11 = arith.addf %8, %10 : vector<16x16xf32>
    %cst_15 = arith.constant dense<0xFF800000> : vector<16xf32>
    %12 = vector.multi_reduction <maximumf>, %11, %cst_15 [1] : vector<16x16xf32> to vector<16xf32>
    %13 = vector.shape_cast %12 : vector<16xf32> to vector<16x1xf32>
    %14 = vector.broadcast %13 : vector<16x1xf32> to vector<16x16xf32>
    %15 = arith.subf %11, %14 : vector<16x16xf32>
    %16 = math.exp %15 : vector<16x16xf32>
    %cst_16 = arith.constant dense<0.000000e+00> : vector<16xf32>
    %17 = vector.multi_reduction <add>, %16, %cst_16 [1] : vector<16x16xf32> to vector<16xf32>
    %18 = vector.shape_cast %17 : vector<16xf32> to vector<16x1xf32>
    %19 = tpu.reciprocal %18 {approx = true} : vector<16x1xf32> -> vector<16x1xf32>
    %20 = vector.broadcast %19 : vector<16x1xf32> to vector<16x16xf32>
    %21 = arith.mulf %16, %20 : vector<16x16xf32>
    %cst_17 = arith.constant dense<0.000000e+00> : vector<16x32xf32>
    %22 = tpu.matmul %21, %5, %cst_17 {dimension_numbers = #tpu.dot_dimension_numbers<[1], [0], [0], [1], [0, 0, 1, 1], [], []>} : vector<16x16xf32>, vector<16x32xf32>, vector<16x32xf32> -> vector<16x32xf32>
    %23 = arith.addf %22, %1 : vector<16x32xf32>
    %c0_18 = arith.constant 0 : index
    %c1 = arith.constant 1 : index
    %c0_19 = arith.constant 0 : index
    %c0_20 = arith.constant 0 : index
    %24 = vector.load %arg1[%c0_18, %c1, %c0_19, %c0_20] : memref<1x4x16x32xf32, #tpu.memory_space<vmem>>, vector<1x1x16x32xf32>
    %25 = vector.shape_cast %24 : vector<1x1x16x32xf32> to vector<16x32xf32>
    %c0_21 = arith.constant 0 : index
    %c1_22 = arith.constant 1 : index
    %c0_23 = arith.constant 0 : index
    %c0_24 = arith.constant 0 : index
    %26 = vector.load %arg2[%c0_21, %c1_22, %c0_23, %c0_24] : memref<1x4x16x32xf32, #tpu.memory_space<vmem>>, vector<1x1x16x32xf32>
    %27 = vector.shape_cast %26 : vector<1x1x16x32xf32> to vector<16x32xf32>
    %c0_25 = arith.constant 0 : index
    %c1_26 = arith.constant 1 : index
    %c0_27 = arith.constant 0 : index
    %c0_28 = arith.constant 0 : index
    %28 = vector.load %arg3[%c0_25, %c1_26, %c0_27, %c0_28] : memref<1x4x16x32xf32, #tpu.memory_space<vmem>>, vector<1x1x16x32xf32>
    %29 = vector.shape_cast %28 : vector<1x1x16x32xf32> to vector<16x32xf32>
    %cst_29 = arith.constant 0.176776692 : f32
    %30 = vector.broadcast %cst_29 : f32 to vector<16x32xf32>
    %31 = arith.mulf %25, %30 : vector<16x32xf32>
    %cst_30 = arith.constant dense<0.000000e+00> : vector<16x16xf32>
    %32 = tpu.matmul %31, %27, %cst_30 {dimension_numbers = #tpu.dot_dimension_numbers<[1], [1], [0], [0], [0, 0, 1, 0], [], []>} : vector<16x32xf32>, vector<16x32xf32>, vector<16x16xf32> -> vector<16x16xf32>
    %c0_31 = arith.constant 0 : index
    %c0_32 = arith.constant 0 : index
    %c0_33 = arith.constant 0 : index
    %33 = vector.load %arg4[%c0_31, %c0_32, %c0_33] : memref<1x16x16xf32, #tpu.memory_space<vmem>>, vector<1x16x16xf32>
    %34 = vector.shape_cast %33 : vector<1x16x16xf32> to vector<16x16xf32>
    %35 = arith.addf %32, %34 : vector<16x16xf32>
    %cst_34 = arith.constant dense<0xFF800000> : vector<16xf32>
    %36 = vector.multi_reduction <maximumf>, %35, %cst_34 [1] : vector<16x16xf32> to vector<16xf32>
    %37 = vector.shape_cast %36 : vector<16xf32> to vector<16x1xf32>
    %38 = vector.broadcast %37 : vector<16x1xf32> to vector<16x16xf32>
    %39 = arith.subf %35, %38 : vector<16x16xf32>
    %40 = math.exp %39 : vector<16x16xf32>
    %cst_35 = arith.constant dense<0.000000e+00> : vector<16xf32>
    %41 = vector.multi_reduction <add>, %40, %cst_35 [1] : vector<16x16xf32> to vector<16xf32>
    %42 = vector.shape_cast %41 : vector<16xf32> to vector<16x1xf32>
    %43 = tpu.reciprocal %42 {approx = true} : vector<16x1xf32> -> vector<16x1xf32>
    %44 = vector.broadcast %43 : vector<16x1xf32> to vector<16x16xf32>
    %45 = arith.mulf %40, %44 : vector<16x16xf32>
    %cst_36 = arith.constant dense<0.000000e+00> : vector<16x32xf32>
    %46 = tpu.matmul %45, %29, %cst_36 {dimension_numbers = #tpu.dot_dimension_numbers<[1], [0], [0], [1], [0, 0, 1, 1], [], []>} : vector<16x16xf32>, vector<16x32xf32>, vector<16x32xf32> -> vector<16x32xf32>
    %47 = arith.addf %46, %25 : vector<16x32xf32>
    %c0_37 = arith.constant 0 : index
    %c2 = arith.constant 2 : index
    %c0_38 = arith.constant 0 : index
    %c0_39 = arith.constant 0 : index
    %48 = vector.load %arg1[%c0_37, %c2, %c0_38, %c0_39] : memref<1x4x16x32xf32, #tpu.memory_space<vmem>>, vector<1x1x16x32xf32>
    %49 = vector.shape_cast %48 : vector<1x1x16x32xf32> to vector<16x32xf32>
    %c0_40 = arith.constant 0 : index
    %c2_41 = arith.constant 2 : index
    %c0_42 = arith.constant 0 : index
    %c0_43 = arith.constant 0 : index
    %50 = vector.load %arg2[%c0_40, %c2_41, %c0_42, %c0_43] : memref<1x4x16x32xf32, #tpu.memory_space<vmem>>, vector<1x1x16x32xf32>
    %51 = vector.shape_cast %50 : vector<1x1x16x32xf32> to vector<16x32xf32>
    %c0_44 = arith.constant 0 : index
    %c2_45 = arith.constant 2 : index
    %c0_46 = arith.constant 0 : index
    %c0_47 = arith.constant 0 : index
    %52 = vector.load %arg3[%c0_44, %c2_45, %c0_46, %c0_47] : memref<1x4x16x32xf32, #tpu.memory_space<vmem>>, vector<1x1x16x32xf32>
    %53 = vector.shape_cast %52 : vector<1x1x16x32xf32> to vector<16x32xf32>
    %cst_48 = arith.constant 0.176776692 : f32
    %54 = vector.broadcast %cst_48 : f32 to vector<16x32xf32>
    %55 = arith.mulf %49, %54 : vector<16x32xf32>
    %cst_49 = arith.constant dense<0.000000e+00> : vector<16x16xf32>
    %56 = tpu.matmul %55, %51, %cst_49 {dimension_numbers = #tpu.dot_dimension_numbers<[1], [1], [0], [0], [0, 0, 1, 0], [], []>} : vector<16x32xf32>, vector<16x32xf32>, vector<16x16xf32> -> vector<16x16xf32>
    %c0_50 = arith.constant 0 : index
    %c0_51 = arith.constant 0 : index
    %c0_52 = arith.constant 0 : index
    %57 = vector.load %arg4[%c0_50, %c0_51, %c0_52] : memref<1x16x16xf32, #tpu.memory_space<vmem>>, vector<1x16x16xf32>
    %58 = vector.shape_cast %57 : vector<1x16x16xf32> to vector<16x16xf32>
    %59 = arith.addf %56, %58 : vector<16x16xf32>
    %cst_53 = arith.constant dense<0xFF800000> : vector<16xf32>
    %60 = vector.multi_reduction <maximumf>, %59, %cst_53 [1] : vector<16x16xf32> to vector<16xf32>
    %61 = vector.shape_cast %60 : vector<16xf32> to vector<16x1xf32>
    %62 = vector.broadcast %61 : vector<16x1xf32> to vector<16x16xf32>
    %63 = arith.subf %59, %62 : vector<16x16xf32>
    %64 = math.exp %63 : vector<16x16xf32>
    %cst_54 = arith.constant dense<0.000000e+00> : vector<16xf32>
    %65 = vector.multi_reduction <add>, %64, %cst_54 [1] : vector<16x16xf32> to vector<16xf32>
    %66 = vector.shape_cast %65 : vector<16xf32> to vector<16x1xf32>
    %67 = tpu.reciprocal %66 {approx = true} : vector<16x1xf32> -> vector<16x1xf32>
    %68 = vector.broadcast %67 : vector<16x1xf32> to vector<16x16xf32>
    %69 = arith.mulf %64, %68 : vector<16x16xf32>
    %cst_55 = arith.constant dense<0.000000e+00> : vector<16x32xf32>
    %70 = tpu.matmul %69, %53, %cst_55 {dimension_numbers = #tpu.dot_dimension_numbers<[1], [0], [0], [1], [0, 0, 1, 1], [], []>} : vector<16x16xf32>, vector<16x32xf32>, vector<16x32xf32> -> vector<16x32xf32>
    %71 = arith.addf %70, %49 : vector<16x32xf32>
    %c0_56 = arith.constant 0 : index
    %c3 = arith.constant 3 : index
    %c0_57 = arith.constant 0 : index
    %c0_58 = arith.constant 0 : index
    %72 = vector.load %arg1[%c0_56, %c3, %c0_57, %c0_58] : memref<1x4x16x32xf32, #tpu.memory_space<vmem>>, vector<1x1x16x32xf32>
    %73 = vector.shape_cast %72 : vector<1x1x16x32xf32> to vector<16x32xf32>
    %c0_59 = arith.constant 0 : index
    %c3_60 = arith.constant 3 : index
    %c0_61 = arith.constant 0 : index
    %c0_62 = arith.constant 0 : index
    %74 = vector.load %arg2[%c0_59, %c3_60, %c0_61, %c0_62] : memref<1x4x16x32xf32, #tpu.memory_space<vmem>>, vector<1x1x16x32xf32>
    %75 = vector.shape_cast %74 : vector<1x1x16x32xf32> to vector<16x32xf32>
    %c0_63 = arith.constant 0 : index
    %c3_64 = arith.constant 3 : index
    %c0_65 = arith.constant 0 : index
    %c0_66 = arith.constant 0 : index
    %76 = vector.load %arg3[%c0_63, %c3_64, %c0_65, %c0_66] : memref<1x4x16x32xf32, #tpu.memory_space<vmem>>, vector<1x1x16x32xf32>
    %77 = vector.shape_cast %76 : vector<1x1x16x32xf32> to vector<16x32xf32>
    %cst_67 = arith.constant 0.176776692 : f32
    %78 = vector.broadcast %cst_67 : f32 to vector<16x32xf32>
    %79 = arith.mulf %73, %78 : vector<16x32xf32>
    %cst_68 = arith.constant dense<0.000000e+00> : vector<16x16xf32>
    %80 = tpu.matmul %79, %75, %cst_68 {dimension_numbers = #tpu.dot_dimension_numbers<[1], [1], [0], [0], [0, 0, 1, 0], [], []>} : vector<16x32xf32>, vector<16x32xf32>, vector<16x16xf32> -> vector<16x16xf32>
    %c0_69 = arith.constant 0 : index
    %c0_70 = arith.constant 0 : index
    %c0_71 = arith.constant 0 : index
    %81 = vector.load %arg4[%c0_69, %c0_70, %c0_71] : memref<1x16x16xf32, #tpu.memory_space<vmem>>, vector<1x16x16xf32>
    %82 = vector.shape_cast %81 : vector<1x16x16xf32> to vector<16x16xf32>
    %83 = arith.addf %80, %82 : vector<16x16xf32>
    %cst_72 = arith.constant dense<0xFF800000> : vector<16xf32>
    %84 = vector.multi_reduction <maximumf>, %83, %cst_72 [1] : vector<16x16xf32> to vector<16xf32>
    %85 = vector.shape_cast %84 : vector<16xf32> to vector<16x1xf32>
    %86 = vector.broadcast %85 : vector<16x1xf32> to vector<16x16xf32>
    %87 = arith.subf %83, %86 : vector<16x16xf32>
    %88 = math.exp %87 : vector<16x16xf32>
    %cst_73 = arith.constant dense<0.000000e+00> : vector<16xf32>
    %89 = vector.multi_reduction <add>, %88, %cst_73 [1] : vector<16x16xf32> to vector<16xf32>
    %90 = vector.shape_cast %89 : vector<16xf32> to vector<16x1xf32>
    %91 = tpu.reciprocal %90 {approx = true} : vector<16x1xf32> -> vector<16x1xf32>
    %92 = vector.broadcast %91 : vector<16x1xf32> to vector<16x16xf32>
    %93 = arith.mulf %88, %92 : vector<16x16xf32>
    %cst_74 = arith.constant dense<0.000000e+00> : vector<16x32xf32>
    %94 = tpu.matmul %93, %77, %cst_74 {dimension_numbers = #tpu.dot_dimension_numbers<[1], [0], [0], [1], [0, 0, 1, 1], [], []>} : vector<16x16xf32>, vector<16x32xf32>, vector<16x32xf32> -> vector<16x32xf32>
    %95 = arith.addf %94, %73 : vector<16x32xf32>
    %96 = tpu.concatenate %23, %47, %71, %95 in 1 : vector<16x32xf32>, vector<16x32xf32>, vector<16x32xf32>, vector<16x32xf32> -> vector<16x128xf32>
    %c0_75 = arith.constant 0 : index
    %c0_76 = arith.constant 0 : index
    %c0_77 = arith.constant 0 : index
    %97 = vector.load %arg5[%c0_75, %c0_76, %c0_77] : memref<1x16x128xf32, #tpu.memory_space<vmem>>, vector<1x16x128xf32>
    %98 = vector.shape_cast %97 : vector<1x16x128xf32> to vector<16x128xf32>
    %99 = vector.shape_cast %96 : vector<16x128xf32> to vector<1x16x128xf32>
    tpu.vector_store %arg5[%c0_75, %c0_76, %c0_77], %99 {strides = array<i32>} : memref<1x16x128xf32, #tpu.memory_space<vmem>>, vector<1x16x128xf32>,
    return
  }
  func.func @transform_0(%arg0: i32) -> (i32, i32, i32, i32) {
    %c0_i32 = arith.constant 0 : i32
    %c0_i32_0 = arith.constant 0 : i32
    %c0_i32_1 = arith.constant 0 : i32
    %c0_i32_2 = arith.constant 0 : i32
    return %arg0, %c0_i32, %c0_i32_0, %c0_i32_1 : i32, i32, i32, i32
  }
  func.func @transform_1(%arg0: i32) -> (i32, i32, i32, i32) {
    %c0_i32 = arith.constant 0 : i32
    %c0_i32_0 = arith.constant 0 : i32
    %c0_i32_1 = arith.constant 0 : i32
    %c0_i32_2 = arith.constant 0 : i32
    return %arg0, %c0_i32, %c0_i32_0, %c0_i32_1 : i32, i32, i32, i32
  }
  func.func @transform_2(%arg0: i32) -> (i32, i32, i32, i32) {
    %c0_i32 = arith.constant 0 : i32
    %c0_i32_0 = arith.constant 0 : i32
    %c0_i32_1 = arith.constant 0 : i32
    %c0_i32_2 = arith.constant 0 : i32
    return %arg0, %c0_i32, %c0_i32_0, %c0_i32_1 : i32, i32, i32, i32
  }
  func.func @transform_3(%arg0: i32) -> (i32, i32, i32) {
    %c0_i32 = arith.constant 0 : i32
    %c0_i32_0 = arith.constant 0 : i32
    %c0_i32_1 = arith.constant 0 : i32
    %c0_i32_2 = arith.constant 0 : i32
    return %c0_i32, %c0_i32_0, %c0_i32_1 : i32, i32, i32
  }
  func.func @transform_4(%arg0: i32) -> (i32, i32, i32) {
    %c0_i32 = arith.constant 0 : i32
    %c0_i32_0 = arith.constant 0 : i32
    %c0_i32_1 = arith.constant 0 : i32
    return %arg0, %c0_i32, %c0_i32_0 : i32, i32, i32
  }
}

</mosaic_0001>

<llo_original>
// kernel: tpu_custom_call.1
$region0: #{tpu_custom_call.1}
  #allocation0 [shape = 'u32[]', space=smem, size = 0x4, offset = 0x4, fixed_abs, tag = 'smem constant byte address 0x4 - core index']
  #allocation1 [shape = 'u32[144,128]{1,0:T(1,128)}', space=vmem, size = 0x12000, scoped, tag = 'internal scratch']
  %s0 = inlined_call_operand.hbm [shape: f32[2,4,16,32], index: 0, kind: input, shape index: {}]
  %s1 = inlined_call_operand.hbm [shape: f32[2,4,16,32], index: 1, kind: input, shape index: {}]
  %s2 = inlined_call_operand.hbm [shape: f32[2,4,16,32], index: 2, kind: input, shape index: {}]
  %s3 = inlined_call_operand.hbm [shape: f32[1,16,16], index: 3, kind: input, shape index: {}]
  %s4 = inlined_call_operand.hbm [shape: f32[2,16,128], index: 4, kind: output, shape index: {}]
  %s5 = sld [smem:[#allocation0]]
  $region65: #{tpu_custom_call.1} parent=0
    _
  %s7 = ssub.s32 1, %s5
  %s8 = scalar_select 0, %s7, %s5
  $region1: #{tpu_custom_call.1} parent=0
    #allocation2 [shape = 'u8[65536]{0}', space=vmem, size = 0x10000, scoped, tag = 'input window, operand 0']
    #allocation3 [shape = 's32[2]{0}', space=sflag, size = 0x8, scoped, tag = 'scoped memory for tpu_custom_call.1']
    #allocation4 [shape = 's32[2]{0}', space=sflag, size = 0x8, scoped, tag = 'scoped memory for tpu_custom_call.1']
    #allocation5 [shape = 'u8[65536]{0}', space=vmem, size = 0x10000, scoped, tag = 'input window, operand 1']
    #allocation6 [shape = 's32[2]{0}', space=sflag, size = 0x8, scoped, tag = 'scoped memory for tpu_custom_call.1']
    #allocation7 [shape = 'u8[65536]{0}', space=vmem, size = 0x10000, scoped, tag = 'input window, operand 2']
    #allocation8 [shape = 'u8[8192]{0}', space=vmem, size = 0x2000, scoped, tag = 'input window, operand 3, single buffered']
    #allocation9 [shape = 's32[1]{0}', space=sflag, size = 0x4, scoped, tag = 'scoped memory for tpu_custom_call.1']
    #allocation10 [shape = 'u8[16384]{0}', space=vmem, size = 0x4000, scoped, tag = 'output window, operand 0']
    %9 = vsyncpa [#allocation3], 0
    %s10 = scalar_lea.sflag [#allocation3], 1
    %11 = vsyncpa %s10, 0
    %12 = vsyncpa [#allocation6], 0
    %s13 = scalar_lea.sflag [#allocation6], 1
    %14 = vsyncpa %s13, 0
    %15 = vsyncpa [#allocation9], 0
    %16 = vsyncpa [#allocation4], 0
    %s17 = scalar_lea.sflag [#allocation4], 1
    %18 = vsyncpa %s17, 0
    loop: start=0, step=1, limit=4
    $region2: #{tpu_custom_call.1} parent=1 // loop_pre_header
      _
    $region3: #{tpu_custom_call.1} parent=1 // loop_header
      %s20 = sphi 0, %s24
      %p21 = scmp.ge.s32.totalorder %s20, 4
      %s30 = sphi 0, %s32
      %s33 = sphi 0, %s30
      %s34 = sphi 0, %s33
      %s50 = sphi 0, %s34
      %s56 = sphi 0, %s58
      %s59 = sphi 0, %s56
      %s60 = sphi 0, %s59
      %s76 = sphi 0, %s60
      %s82 = sphi 0, %s84
      %s85 = sphi 0, %s82
      %s86 = sphi 0, %s85
      %s102 = sphi 0, %s86
      %s106 = sphi 0, %s106
      %s108 = sphi 0, %s106
      %s109 = sphi 0, %s108
      %s123 = sphi 0, %s109
      %s129 = sphi 0, %s131
      %s132 = sphi 0, %s129
      %s133 = sphi 0, %s132
      %s149 = sphi 0, %s133
    $region4: #{tpu_custom_call.1} parent=1 // loop_header_branch
      %23 = sbr.rel (%p21) target = $region8
    $region5: #{tpu_custom_call.1} parent=1 // loop_body
      %s25 = ssub.s32 %s20, 1
      %s26 = ssub.s32 %s20, 2
      %s27 = sadd.s32 %s20, 1
      %s28 = ssub.s32 %s20, %s27
      %p29 = scmp.eq.s32.totalorder %s28, 0
      %s31 = sadd.s32 %s30, 1
      %s32 = scalar_select %p29, %s30, %s31
      %p35 = pneg %p29
      %p36 = scmp.eq.s32.totalorder %s20, 1
      %p37 = por %p35, %p36
      %p38 = scmp.ne.s32.totalorder %s30, %s33
      %p39 = scmp.eq.s32.totalorder %s20, 0
      %p40 = por %p38, %p39
      %p41 = scmp.ne.s32.totalorder %s30, %s33
      %p42 = scmp.eq.s32.totalorder %s25, 1
      %p43 = por %p41, %p42
      %p44 = scmp.ne.s32.totalorder %s33, %s34
      %p45 = scmp.eq.s32.totalorder %s25, 0
      %p46 = por %p44, %p45
      %p47 = scmp.ne.s32.totalorder %s33, %s34
      %p48 = scmp.eq.s32.totalorder %s26, 1
      %p49 = por %p47, %p48
      %p51 = scmp.ne.s32.totalorder %s34, %s50
      %p52 = scmp.eq.s32.totalorder %s26, 0
      %p53 = por %p51, %p52
      %s54 = ssub.s32 %s20, %s27
      %p55 = scmp.eq.s32.totalorder %s54, 0
      %s57 = sadd.s32 %s56, 1
      %s58 = scalar_select %p55, %s56, %s57
      %p61 = pneg %p55
      %p62 = scmp.eq.s32.totalorder %s20, 1
      %p63 = por %p61, %p62
      %p64 = scmp.ne.s32.totalorder %s56, %s59
      %p65 = scmp.eq.s32.totalorder %s20, 0
      %p66 = por %p64, %p65
      %p67 = scmp.ne.s32.totalorder %s56, %s59
      %p68 = scmp.eq.s32.totalorder %s25, 1
      %p69 = por %p67, %p68
      %p70 = scmp.ne.s32.totalorder %s59, %s60
      %p71 = scmp.eq.s32.totalorder %s25, 0
      %p72 = por %p70, %p71
      %p73 = scmp.ne.s32.totalorder %s59, %s60
      %p74 = scmp.eq.s32.totalorder %s26, 1
      %p75 = por %p73, %p74
      %p77 = scmp.ne.s32.totalorder %s60, %s76
      %p78 = scmp.eq.s32.totalorder %s26, 0
      %p79 = por %p77, %p78
      %s80 = ssub.s32 %s20, %s27
      %p81 = scmp.eq.s32.totalorder %s80, 0
      %s83 = sadd.s32 %s82, 1
      %s84 = scalar_select %p81, %s82, %s83
      %p87 = pneg %p81
      %p88 = scmp.eq.s32.totalorder %s20, 1
      %p89 = por %p87, %p88
      %p90 = scmp.ne.s32.totalorder %s82, %s85
      %p91 = scmp.eq.s32.totalorder %s20, 0
      %p92 = por %p90, %p91
      %p93 = scmp.ne.s32.totalorder %s82, %s85
      %p94 = scmp.eq.s32.totalorder %s25, 1
      %p95 = por %p93, %p94
      %p96 = scmp.ne.s32.totalorder %s85, %s86
      %p97 = scmp.eq.s32.totalorder %s25, 0
      %p98 = por %p96, %p97
      %p99 = scmp.ne.s32.totalorder %s85, %s86
      %p100 = scmp.eq.s32.totalorder %s26, 1
      %p101 = por %p99, %p100
      %p103 = scmp.ne.s32.totalorder %s86, %s102
      %p104 = scmp.eq.s32.totalorder %s26, 0
      %p105 = por %p103, %p104
      %s107 = sadd.s32 %s106, 1
      %p110 = scmp.eq.s32.totalorder %s20, 1
      %p111 = scmp.ne.s32.totalorder %s106, %s108
      %p112 = scmp.eq.s32.totalorder %s20, 0
      %p113 = por %p111, %p112
      %p114 = scmp.ne.s32.totalorder %s106, %s108
      %p115 = scmp.eq.s32.totalorder %s25, 1
      %p116 = por %p114, %p115
      %p117 = scmp.ne.s32.totalorder %s108, %s109
      %p118 = scmp.eq.s32.totalorder %s25, 0
      %p119 = por %p117, %p118
      %p120 = scmp.ne.s32.totalorder %s108, %s109
      %p121 = scmp.eq.s32.totalorder %s26, 1
      %p122 = por %p120, %p121
      %p124 = scmp.ne.s32.totalorder %s109, %s123
      %p125 = scmp.eq.s32.totalorder %s26, 0
      %p126 = por %p124, %p125
      %s127 = ssub.s32 %s20, %s27
      %p128 = scmp.eq.s32.totalorder %s127, 0
      %s130 = sadd.s32 %s129, 1
      %s131 = scalar_select %p128, %s129, %s130
      %p134 = pneg %p128
      %p135 = scmp.eq.s32.totalorder %s20, 1
      %p136 = por %p134, %p135
      %p137 = scmp.ne.s32.totalorder %s129, %s132
      %p138 = scmp.eq.s32.totalorder %s20, 0
      %p139 = por %p137, %p138
      %p140 = scmp.ne.s32.totalorder %s129, %s132
      %p141 = scmp.eq.s32.totalorder %s25, 1
      %p142 = por %p140, %p141
      %p143 = scmp.ne.s32.totalorder %s132, %s133
      %p144 = scmp.eq.s32.totalorder %s25, 0
      %p145 = por %p143, %p144
      %p146 = scmp.ne.s32.totalorder %s132, %s133
      %p147 = scmp.eq.s32.totalorder %s26, 1
      %p148 = por %p146, %p147
      %p150 = scmp.ne.s32.totalorder %s133, %s149
      %p151 = scmp.eq.s32.totalorder %s26, 0
      %p152 = por %p150, %p151
      %p153 = scmp.le.s32.totalorder 1, %s20
      %p154 = scmp.lt.s32.totalorder %s20, 3
      %p155 = pnand %p153, %p154
      %p156 = pneg %p155
      // Predicated region
      $region9: #{tpu_custom_call.1} parent=5 // pred_check
        _
      $region10: #{tpu_custom_call.1} parent=5 // pred_check_branch
        %158 = sbr.rel (%p155) target = $region12
      $region11: #{tpu_custom_call.1} parent=5 // pred_region
        %s159 = ssub.s32 %s20, 1
        // Predicated region
        $region13: #{tpu_custom_call.1} parent=11 // pred_check
          %p160 = pneg %p119
        $region14: #{tpu_custom_call.1} parent=11 // pred_check_branch
          %162 = sbr.rel (%p160) target = $region16
        $region15: #{tpu_custom_call.1} parent=11 // pred_region
          %s164 = ssub.s32 256, 256
          %165 = vsyncadd [#allocation9], %s164
          %s166 = sshll.u32 [#allocation8], 4
          %s167 = int_to_ptr.vmem [resolvable:$true] %s166
          %172 = dma.hbm_to_vmem [thread:$0]  %s3, 256, %s167, [#allocation9], 128, 128, 8
        $region16: #{tpu_custom_call.1} parent=11 // pred_fallthru
          _
      $region12: #{tpu_custom_call.1} parent=5 // pred_fallthru
        _
      %p173 = scmp.lt.s32.totalorder %s20, 2
      // Predicated region
      $region17: #{tpu_custom_call.1} parent=5 // pred_check
        %p174 = pneg %p173
      $region18: #{tpu_custom_call.1} parent=5 // pred_check_branch
        %176 = sbr.rel (%p174) target = $region20
      $region19: #{tpu_custom_call.1} parent=5 // pred_region
        // Predicated region
        $region21: #{tpu_custom_call.1} parent=19 // pred_check
          %p177 = pneg %p40
        $region22: #{tpu_custom_call.1} parent=19 // pred_check_branch
          %179 = sbr.rel (%p177) target = $region24
        $region23: #{tpu_custom_call.1} parent=19 // pred_region
          %s180 = sand.u32 %s30, 1
          %s181 = scalar_lea.sflag [#allocation3], %s180
          %s182 = sand.u32 %s30, 1
          %s183 = smul.addr %s182, 64
          %s184 = scalar_lea.vmem [#allocation2], %s183
          %s186 = ssub.s32 1024, 1024
          %187 = vsyncadd %s181, %s186
          %s188 = smul.addr %s20, 8
          %s189 = smul.addr %s188, 128
          %s190 = scalar_lea.hbm %s0, %s189
          %s191 = sshll.u32 %s184, 4
          %s192 = int_to_ptr.vmem [resolvable:$true] %s191
          %197 = dma.hbm_to_vmem [thread:$0]  %s190, 1024, %s192, %s181, 128, 128, 8
        $region24: #{tpu_custom_call.1} parent=19 // pred_fallthru
          _
        // Predicated region
        $region25: #{tpu_custom_call.1} parent=19 // pred_check
          %p198 = pneg %p66
        $region26: #{tpu_custom_call.1} parent=19 // pred_check_branch
          %200 = sbr.rel (%p198) target = $region28
        $region27: #{tpu_custom_call.1} parent=19 // pred_region
          %s201 = sand.u32 %s20, 1
          %s202 = scalar_lea.sflag [#allocation6], %s201
          %s203 = sand.u32 %s56, 1
          %s204 = smul.addr %s203, 64
          %s205 = scalar_lea.vmem [#allocation5], %s204
          %s207 = ssub.s32 1024, 1024
          %208 = vsyncadd %s202, %s207
          %s209 = smul.addr %s20, 8
          %s210 = smul.addr %s209, 128
          %s211 = scalar_lea.hbm %s1, %s210
          %s212 = sshll.u32 %s205, 4
          %s213 = int_to_ptr.vmem [resolvable:$true] %s212
          %218 = dma.hbm_to_vmem [thread:$0]  %s211, 1024, %s213, %s202, 128, 128, 8
        $region28: #{tpu_custom_call.1} parent=19 // pred_fallthru
          _
        // Predicated region
        $region29: #{tpu_custom_call.1} parent=19 // pred_check
          %p219 = pneg %p92
        $region30: #{tpu_custom_call.1} parent=19 // pred_check_branch
          %221 = sbr.rel (%p219) target = $region32
        $region31: #{tpu_custom_call.1} parent=19 // pred_region
          %s222 = sand.u32 %s20, 1
          %s223 = scalar_lea.sflag [#allocation6], %s222
          %s224 = sand.u32 %s82, 1
          %s225 = smul.addr %s224, 64
          %s226 = scalar_lea.vmem [#allocation7], %s225
          %s228 = ssub.s32 1024, 1024
          %229 = vsyncadd %s223, %s228
          %s230 = smul.addr %s20, 8
          %s231 = smul.addr %s230, 128
          %s232 = scalar_lea.hbm %s2, %s231
          %s233 = sshll.u32 %s226, 4
          %s234 = int_to_ptr.vmem [resolvable:$true] %s233
          %239 = dma.hbm_to_vmem [thread:$0]  %s232, 1024, %s234, %s223, 128, 128, 8
        $region32: #{tpu_custom_call.1} parent=19 // pred_fallthru
          _
      $region20: #{tpu_custom_call.1} parent=5 // pred_fallthru
        _
      %p240 = scmp.le.s32.totalorder 1, %s20
      %p241 = scmp.lt.s32.totalorder %s20, 3
      %p242 = pnand %p240, %p241
      %p243 = pneg %p242
      // Predicated region
      $region33: #{tpu_custom_call.1} parent=5 // pred_check
        _
      $region34: #{tpu_custom_call.1} parent=5 // pred_check_branch
        %245 = sbr.rel (%p242) target = $region36
      $region35: #{tpu_custom_call.1} parent=5 // pred_region
        %s246 = ssub.s32 %s20, 1
        %s247 = sand.u32 %s33, 1
        %s248 = scalar_lea.sflag [#allocation3], %s247
        %s249 = sand.u32 %s33, 1
        %s250 = smul.addr %s249, 64
        %s251 = scalar_lea.vmem [#allocation2], %s250
        // Predicated region
        $region37: #{tpu_custom_call.1} parent=35 // pred_check
          %p252 = pneg %p46
        $region38: #{tpu_custom_call.1} parent=35 // pred_check_branch
          %254 = sbr.rel (%p252) target = $region40
        $region39: #{tpu_custom_call.1} parent=35 // pred_region
          %255 = dma.done %s248, 1024
        $region40: #{tpu_custom_call.1} parent=35 // pred_fallthru
          _
        %s256 = sand.u32 %s25, 1
        %s257 = scalar_lea.sflag [#allocation6], %s256
        %s258 = sand.u32 %s59, 1
        %s259 = smul.addr %s258, 64
        %s260 = scalar_lea.vmem [#allocation5], %s259
        // Predicated region
        $region41: #{tpu_custom_call.1} parent=35 // pred_check
          %p261 = pneg %p72
        $region42: #{tpu_custom_call.1} parent=35 // pred_check_branch
          %263 = sbr.rel (%p261) target = $region44
        $region43: #{tpu_custom_call.1} parent=35 // pred_region
          %264 = dma.done %s257, 1024
        $region44: #{tpu_custom_call.1} parent=35 // pred_fallthru
          _
        %s265 = sand.u32 %s25, 1
        %s266 = scalar_lea.sflag [#allocation6], %s265
        %s267 = sand.u32 %s85, 1
        %s268 = smul.addr %s267, 64
        %s269 = scalar_lea.vmem [#allocation7], %s268
        // Predicated region
        $region45: #{tpu_custom_call.1} parent=35 // pred_check
          %p270 = pneg %p98
        $region46: #{tpu_custom_call.1} parent=35 // pred_check_branch
          %272 = sbr.rel (%p270) target = $region48
        $region47: #{tpu_custom_call.1} parent=35 // pred_region
          %273 = dma.done %s266, 1024
        $region48: #{tpu_custom_call.1} parent=35 // pred_fallthru
          _
        // Predicated region
        $region49: #{tpu_custom_call.1} parent=35 // pred_check
          %p274 = pneg %p119
        $region50: #{tpu_custom_call.1} parent=35 // pred_check_branch
          %276 = sbr.rel (%p274) target = $region52
        $region51: #{tpu_custom_call.1} parent=35 // pred_region
          %277 = dma.done [#allocation9], 256
        $region52: #{tpu_custom_call.1} parent=35 // pred_fallthru
          _
        %s278 = sand.u32 %s33, 1
        %s279 = scalar_lea.sflag [#allocation3], %s278
        %s280 = sand.u32 %s33, 1
        %s281 = smul.addr %s280, 64
        %s282 = scalar_lea.vmem [#allocation2], %s281
        %p283 = pneg %p46
        %p284 = pneg %p43
        %s285 = sand.u32 %s25, 1
        %s286 = scalar_lea.sflag [#allocation6], %s285
        %s287 = sand.u32 %s59, 1
        %s288 = smul.addr %s287, 64
        %s289 = scalar_lea.vmem [#allocation5], %s288
        %p290 = pneg %p72
        %p291 = pneg %p69
        %s292 = sand.u32 %s25, 1
        %s293 = scalar_lea.sflag [#allocation6], %s292
        %s294 = sand.u32 %s85, 1
        %s295 = smul.addr %s294, 64
        %s296 = scalar_lea.vmem [#allocation7], %s295
        %p297 = pneg %p98
        %p298 = pneg %p95
        %p299 = pneg %p119
        %p300 = pneg %p116
        %p301 = pneg %p145
        %p302 = pneg %p142
        %s303 = sand.u32 %s132, 1
        %s304 = scalar_lea.sflag [#allocation4], %s303
        %s305 = sand.u32 %s132, 1
        %s306 = smul.addr %s305, 16
        %s307 = scalar_lea.vmem [#allocation10], %s306
        %v308 = vld [vmem:[%s251] sm:$0xff]
        %v309 = vld [vmem:[%s251 + $0x8] sm:$0xff]
        %v310 = vld [vmem:[%s260] sm:$0xff]
        %v311 = vld [vmem:[%s260 + $0x8] sm:$0xff]
        %v312 = vld [vmem:[%s269] sm:$0xff]
        %v313 = vld [vmem:[%s269 + $0x8] sm:$0xff]
        %v314 = vmul.f32 %v308, 0.17677669
        %v315 = vmul.f32 %v309, 0.17677669
        %v316 = vld [vmem:[#allocation8] sm:$0xff]
        %v317 = vld [vmem:[#allocation8 + $0x8] sm:$0xff]
        %vm318 = vcmask 261120
        %v320 = vsel %vm318, %v314, 0
        %v323 = vsel %vm318, %v315, 0
        %v326 = vsel %vm318, %v310, 0
        %v329 = vsel %vm318, %v311, 0
        %331 = vmatprep.subr.mxu0 0.0
        %332 = vmatpush1.xpose.msra.mxu0 %v326
        %333 = vmatprep.subr.mxu0 0.0
        %334 = vmatpush1.xpose.msra.mxu0 %v329
        %335 = vmatprep.subr.mxu0 0.0
        %336 = vmatpush1.xpose.msra.mxu0 0.0
        %337 = vmatprep.subr.mxu0 0.0
        %338 = vmatpush1.xpose.msra.mxu0 0.0
        %339 = vmatprep.subr.mxu0 0.0
        %340 = vmatpush1.xpose.msra.mxu0 0.0
        %341 = vmatprep.subr.mxu0 0.0
        %342 = vmatpush1.xpose.msra.mxu0 0.0
        %343 = vmatprep.subr.mxu0 0.0
        %344 = vmatpush1.xpose.msra.mxu0 0.0
        %345 = vmatprep.subr.mxu0 0.0
        %346 = vmatpush1.xpose.msra.mxu0 0.0
        %347 = vmatprep.subr.mxu0 0.0
        %348 = vmatpush1.xpose.msra.mxu0 0.0
        %349 = vmatprep.subr.mxu0 0.0
        %350 = vmatpush1.xpose.msra.mxu0 0.0
        %351 = vmatprep.subr.mxu0 0.0
        %352 = vmatpush1.xpose.msra.mxu0 0.0
        %353 = vmatprep.subr.mxu0 0.0
        %354 = vmatpush1.xpose.msra.mxu0 0.0
        %355 = vmatprep.subr.mxu0 0.0
        %356 = vmatpush1.xpose.msra.mxu0 0.0
        %357 = vmatprep.subr.mxu0 0.0
        %358 = vmatpush1.xpose.msra.mxu0 0.0
        %359 = vmatprep.subr.mxu0 0.0
        %360 = vmatpush1.xpose.msra.mxu0 0.0
        %361 = vmatprep.subr.mxu0 0.0
        %362 = vmatpush1.xpose.msra.mxu0 0.0
        %363 = vmatprep.subr.mxu0 0.0
        %364 = vmatpush1.xpose.msra.mxu0 0.0
        %365 = vmatprep.subr.mxu0 0.0
        %366 = vmatpush1.xpose.msra.mxu0 0.0
        %367 = vmatprep.subr.mxu0 0.0
        %368 = vmatpush1.xpose.msra.mxu0 0.0
        %369 = vmatprep.subr.mxu0 0.0
        %370 = vmatpush1.xpose.msra.mxu0 0.0
        %371 = vmatprep.subr.mxu0 0.0
        %372 = vmatpush1.xpose.msra.mxu0 0.0
        %373 = vmatprep.subr.mxu0 0.0
        %374 = vmatpush1.xpose.msra.mxu0 0.0
        %375 = vmatprep.subr.mxu0 0.0
        %376 = vmatpush1.xpose.msra.mxu0 0.0
        %377 = vmatprep.subr.mxu0 0.0
        %378 = vmatpush1.xpose.msra.mxu0 0.0
        %379 = vmatprep.subr.mxu0 0.0
        %380 = vmatpush1.xpose.msra.mxu0 0.0
        %381 = vmatprep.subr.mxu0 0.0
        %382 = vmatpush1.xpose.msra.mxu0 0.0
        %383 = vmatprep.subr.mxu0 0.0
        %384 = vmatpush1.xpose.msra.mxu0 0.0
        %385 = vmatprep.subr.mxu0 0.0
        %386 = vmatpush1.xpose.msra.mxu0 0.0
        %387 = vmatprep.subr.mxu0 0.0
        %388 = vmatpush1.xpose.msra.mxu0 0.0
        %389 = vmatprep.subr.mxu0 0.0
        %390 = vmatpush1.xpose.msra.mxu0 0.0
        %391 = vmatprep.subr.mxu0 0.0
        %392 = vmatpush1.xpose.msra.mxu0 0.0
        %393 = vmatprep.subr.mxu0 0.0
        %394 = vmatpush1.xpose.msra.mxu0 0.0
        %395 = vmatprep.mubr.f32.mxu0 0.0
        %396 = vmatmul.mubr.f32.gmra.mrb[0].mxu0 %v320
        %v397 = vpop.f32.mrb[0].mxu0
        %v398 = vadd.f32 %v316, %v397
        %v399 = vpop.f32.mrb[0].mxu0
        %400 = vmatprep.mubr.f32.mxu0 0.0
        %401 = vmatmul.mubr.f32.gmra.mrb[0].mxu0 %v323
        %v402 = vpop.f32.mrb[0].mxu0
        %v403 = vadd.f32 %v317, %v402
        %v404 = vpop.f32.mrb[0].mxu0
        %405 = vdwg.mxu0
        %vm406 = vcmask 130048
        %v407 = vsel %vm406, %v398, -inf
        %408 = vmax.xlane.f32.xlu0 %v407
        %v409 = vpop.xlane.xlu0 %408
        %v410 = vsel %vm406, %v403, -inf
        %411 = vmax.xlane.f32.xlu0 %v410
        %v412 = vpop.xlane.xlu0 %411
        %v413 = vsub.f32 %v398, %v409
        %v414 = vsub.f32 %v403, %v412
        %v415 = vmul.f32 %v413, 1.442695
        %v416 = vpow.pop %v415
        %v417 = vmul.f32 %v414, 1.442695
        %v418 = vpow.pop %v417
        %v419 = vsel %vm406, %v416, 0.0
        %420 = vadd.xlane.f32.xlu0 %v419
        %v421 = vpop.xlane.xlu0 %420
        %v422 = vsel %vm406, %v418, 0.0
        %423 = vadd.xlane.f32.xlu0 %v422
        %v424 = vpop.xlane.xlu0 %423
        %v425 = vrcp.pop %v421
        %v426 = vrcp.pop %v424
        %v427 = vmul.f32 %v416, %v425
        %v428 = vmul.f32 %v418, %v426
        %v430 = vsel %vm406, %v427, 0
        %v433 = vsel %vm406, %v428, 0
        %435 = vmatprep.subr.mxu0 0.0
        %436 = vmatpush1.msra.mxu0 %v312
        %437 = vmatprep.subr.mxu0 0.0
        %438 = vmatpush1.msra.mxu0 %v313
        %439 = vmatprep.subr.mxu0 0.0
        %440 = vmatpush1.msra.mxu0 0.0
        %441 = vmatprep.subr.mxu0 0.0
        %442 = vmatpush1.msra.mxu0 0.0
        %443 = vmatprep.subr.mxu0 0.0
        %444 = vmatpush1.msra.mxu0 0.0
        %445 = vmatprep.subr.mxu0 0.0
        %446 = vmatpush1.msra.mxu0 0.0
        %447 = vmatprep.subr.mxu0 0.0
        %448 = vmatpush1.msra.mxu0 0.0
        %449 = vmatprep.subr.mxu0 0.0
        %450 = vmatpush1.msra.mxu0 0.0
        %451 = vmatprep.subr.mxu0 0.0
        %452 = vmatpush1.msra.mxu0 0.0
        %453 = vmatprep.subr.mxu0 0.0
        %454 = vmatpush1.msra.mxu0 0.0
        %455 = vmatprep.subr.mxu0 0.0
        %456 = vmatpush1.msra.mxu0 0.0
        %457 = vmatprep.subr.mxu0 0.0
        %458 = vmatpush1.msra.mxu0 0.0
        %459 = vmatprep.subr.mxu0 0.0
        %460 = vmatpush1.msra.mxu0 0.0
        %461 = vmatprep.subr.mxu0 0.0
        %462 = vmatpush1.msra.mxu0 0.0
        %463 = vmatprep.subr.mxu0 0.0
        %464 = vmatpush1.msra.mxu0 0.0
        %465 = vmatprep.subr.mxu0 0.0
        %466 = vmatpush1.msra.mxu0 0.0
        %467 = vmatprep.subr.mxu0 0.0
        %468 = vmatpush1.msra.mxu0 0.0
        %469 = vmatprep.subr.mxu0 0.0
        %470 = vmatpush1.msra.mxu0 0.0
        %471 = vmatprep.subr.mxu0 0.0
        %472 = vmatpush1.msra.mxu0 0.0
        %473 = vmatprep.subr.mxu0 0.0
        %474 = vmatpush1.msra.mxu0 0.0
        %475 = vmatprep.subr.mxu0 0.0
        %476 = vmatpush1.msra.mxu0 0.0
        %477 = vmatprep.subr.mxu0 0.0
        %478 = vmatpush1.msra.mxu0 0.0
        %479 = vmatprep.subr.mxu0 0.0
        %480 = vmatpush1.msra.mxu0 0.0
        %481 = vmatprep.subr.mxu0 0.0
        %482 = vmatpush1.msra.mxu0 0.0
        %483 = vmatprep.subr.mxu0 0.0
        %484 = vmatpush1.msra.mxu0 0.0
        %485 = vmatprep.subr.mxu0 0.0
        %486 = vmatpush1.msra.mxu0 0.0
        %487 = vmatprep.subr.mxu0 0.0
        %488 = vmatpush1.msra.mxu0 0.0
        %489 = vmatprep.subr.mxu0 0.0
        %490 = vmatpush1.msra.mxu0 0.0
        %491 = vmatprep.subr.mxu0 0.0
        %492 = vmatpush1.msra.mxu0 0.0
        %493 = vmatprep.subr.mxu0 0.0
        %494 = vmatpush1.msra.mxu0 0.0
        %495 = vmatprep.subr.mxu0 0.0
        %496 = vmatpush1.msra.mxu0 0.0
        %497 = vmatprep.subr.mxu0 0.0
        %498 = vmatpush1.msra.mxu0 0.0
        %499 = vmatprep.mubr.f32.mxu0 0.0
        %500 = vmatmul.mubr.f32.gmra.mrb[0].mxu0 %v430
        %v501 = vpop.f32.mrb[0].mxu0
        %v502 = vadd.f32 %v308, %v501
        %v503 = vpop.f32.mrb[0].mxu0
        %504 = vmatprep.mubr.f32.mxu0 0.0
        %505 = vmatmul.mubr.f32.gmra.mrb[0].mxu0 %v433
        %v506 = vpop.f32.mrb[0].mxu0
        %v507 = vadd.f32 %v309, %v506
        %v508 = vpop.f32.mrb[0].mxu0
        %509 = vdwg.mxu0
        %s510 = scalar_lea.vmem %s251, 16 [#allocation2]
        %v511 = vld [vmem:[%s510] sm:$0xff]
        %v512 = vld [vmem:[%s510 + $0x8] sm:$0xff]
        %s513 = scalar_lea.vmem %s260, 16 [#allocation5]
        %v514 = vld [vmem:[%s513] sm:$0xff]
        %v515 = vld [vmem:[%s513 + $0x8] sm:$0xff]
        %s516 = scalar_lea.vmem %s269, 16 [#allocation7]
        %v517 = vld [vmem:[%s516] sm:$0xff]
        %v518 = vld [vmem:[%s516 + $0x8] sm:$0xff]
        %v519 = vmul.f32 %v511, 0.17677669
        %v520 = vmul.f32 %v512, 0.17677669
        %v522 = vsel %vm318, %v519, 0
        %v525 = vsel %vm318, %v520, 0
        %v528 = vsel %vm318, %v514, 0
        %v531 = vsel %vm318, %v515, 0
        %533 = vmatprep.subr.mxu0 0.0
        %534 = vmatpush1.xpose.msra.mxu0 %v528
        %535 = vmatprep.subr.mxu0 0.0
        %536 = vmatpush1.xpose.msra.mxu0 %v531
        %537 = vmatprep.subr.mxu0 0.0
        %538 = vmatpush1.xpose.msra.mxu0 0.0
        %539 = vmatprep.subr.mxu0 0.0
        %540 = vmatpush1.xpose.msra.mxu0 0.0
        %541 = vmatprep.subr.mxu0 0.0
        %542 = vmatpush1.xpose.msra.mxu0 0.0
        %543 = vmatprep.subr.mxu0 0.0
        %544 = vmatpush1.xpose.msra.mxu0 0.0
        %545 = vmatprep.subr.mxu0 0.0
        %546 = vmatpush1.xpose.msra.mxu0 0.0
        %547 = vmatprep.subr.mxu0 0.0
        %548 = vmatpush1.xpose.msra.mxu0 0.0
        %549 = vmatprep.subr.mxu0 0.0
        %550 = vmatpush1.xpose.msra.mxu0 0.0
        %551 = vmatprep.subr.mxu0 0.0
        %552 = vmatpush1.xpose.msra.mxu0 0.0
        %553 = vmatprep.subr.mxu0 0.0
        %554 = vmatpush1.xpose.msra.mxu0 0.0
        %555 = vmatprep.subr.mxu0 0.0
        %556 = vmatpush1.xpose.msra.mxu0 0.0
        %557 = vmatprep.subr.mxu0 0.0
        %558 = vmatpush1.xpose.msra.mxu0 0.0
        %559 = vmatprep.subr.mxu0 0.0
        %560 = vmatpush1.xpose.msra.mxu0 0.0
        %561 = vmatprep.subr.mxu0 0.0
        %562 = vmatpush1.xpose.msra.mxu0 0.0
        %563 = vmatprep.subr.mxu0 0.0
        %564 = vmatpush1.xpose.msra.mxu0 0.0
        %565 = vmatprep.subr.mxu0 0.0
        %566 = vmatpush1.xpose.msra.mxu0 0.0
        %567 = vmatprep.subr.mxu0 0.0
        %568 = vmatpush1.xpose.msra.mxu0 0.0
        %569 = vmatprep.subr.mxu0 0.0
        %570 = vmatpush1.xpose.msra.mxu0 0.0
        %571 = vmatprep.subr.mxu0 0.0
        %572 = vmatpush1.xpose.msra.mxu0 0.0
        %573 = vmatprep.subr.mxu0 0.0
        %574 = vmatpush1.xpose.msra.mxu0 0.0
        %575 = vmatprep.subr.mxu0 0.0
        %576 = vmatpush1.xpose.msra.mxu0 0.0
        %577 = vmatprep.subr.mxu0 0.0
        %578 = vmatpush1.xpose.msra.mxu0 0.0
        %579 = vmatprep.subr.mxu0 0.0
        %580 = vmatpush1.xpose.msra.mxu0 0.0
        %581 = vmatprep.subr.mxu0 0.0
        %582 = vmatpush1.xpose.msra.mxu0 0.0
        %583 = vmatprep.subr.mxu0 0.0
        %584 = vmatpush1.xpose.msra.mxu0 0.0
        %585 = vmatprep.subr.mxu0 0.0
        %586 = vmatpush1.xpose.msra.mxu0 0.0
        %587 = vmatprep.subr.mxu0 0.0
        %588 = vmatpush1.xpose.msra.mxu0 0.0
        %589 = vmatprep.subr.mxu0 0.0
        %590 = vmatpush1.xpose.msra.mxu0 0.0
        %591 = vmatprep.subr.mxu0 0.0
        %592 = vmatpush1.xpose.msra.mxu0 0.0
        %593 = vmatprep.subr.mxu0 0.0
        %594 = vmatpush1.xpose.msra.mxu0 0.0
        %595 = vmatprep.subr.mxu0 0.0
        %596 = vmatpush1.xpose.msra.mxu0 0.0
        %597 = vmatprep.mubr.f32.mxu0 0.0
        %598 = vmatmul.mubr.f32.gmra.mrb[0].mxu0 %v522
        %v599 = vpop.f32.mrb[0].mxu0
        %v600 = vadd.f32 %v316, %v599
        %v601 = vpop.f32.mrb[0].mxu0
        %602 = vmatprep.mubr.f32.mxu0 0.0
        %603 = vmatmul.mubr.f32.gmra.mrb[0].mxu0 %v525
        %v604 = vpop.f32.mrb[0].mxu0
        %v605 = vadd.f32 %v317, %v604
        %v606 = vpop.f32.mrb[0].mxu0
        %607 = vdwg.mxu0
        %v608 = vsel %vm406, %v600, -inf
        %609 = vmax.xlane.f32.xlu0 %v608
        %v610 = vpop.xlane.xlu0 %609
        %v611 = vsel %vm406, %v605, -inf
        %612 = vmax.xlane.f32.xlu0 %v611
        %v613 = vpop.xlane.xlu0 %612
        %v614 = vsub.f32 %v600, %v610
        %v615 = vsub.f32 %v605, %v613
        %v616 = vmul.f32 %v614, 1.442695
        %v617 = vpow.pop %v616
        %v618 = vmul.f32 %v615, 1.442695
        %v619 = vpow.pop %v618
        %v620 = vsel %vm406, %v617, 0.0
        %621 = vadd.xlane.f32.xlu0 %v620
        %v622 = vpop.xlane.xlu0 %621
        %v623 = vsel %vm406, %v619, 0.0
        %624 = vadd.xlane.f32.xlu0 %v623
        %v625 = vpop.xlane.xlu0 %624
        %v626 = vrcp.pop %v622
        %v627 = vrcp.pop %v625
        %v628 = vmul.f32 %v617, %v626
        %v629 = vmul.f32 %v619, %v627
        %v631 = vsel %vm406, %v628, 0
        %v634 = vsel %vm406, %v629, 0
        %636 = vmatprep.subr.mxu0 0.0
        %637 = vmatpush1.msra.mxu0 %v517
        %638 = vmatprep.subr.mxu0 0.0
        %639 = vmatpush1.msra.mxu0 %v518
        %640 = vmatprep.subr.mxu0 0.0
        %641 = vmatpush1.msra.mxu0 0.0
        %642 = vmatprep.subr.mxu0 0.0
        %643 = vmatpush1.msra.mxu0 0.0
        %644 = vmatprep.subr.mxu0 0.0
        %645 = vmatpush1.msra.mxu0 0.0
        %646 = vmatprep.subr.mxu0 0.0
        %647 = vmatpush1.msra.mxu0 0.0
        %648 = vmatprep.subr.mxu0 0.0
        %649 = vmatpush1.msra.mxu0 0.0
        %650 = vmatprep.subr.mxu0 0.0
        %651 = vmatpush1.msra.mxu0 0.0
        %652 = vmatprep.subr.mxu0 0.0
        %653 = vmatpush1.msra.mxu0 0.0
        %654 = vmatprep.subr.mxu0 0.0
        %655 = vmatpush1.msra.mxu0 0.0
        %656 = vmatprep.subr.mxu0 0.0
        %657 = vmatpush1.msra.mxu0 0.0
        %658 = vmatprep.subr.mxu0 0.0
        %659 = vmatpush1.msra.mxu0 0.0
        %660 = vmatprep.subr.mxu0 0.0
        %661 = vmatpush1.msra.mxu0 0.0
        %662 = vmatprep.subr.mxu0 0.0
        %663 = vmatpush1.msra.mxu0 0.0
        %664 = vmatprep.subr.mxu0 0.0
        %665 = vmatpush1.msra.mxu0 0.0
        %666 = vmatprep.subr.mxu0 0.0
        %667 = vmatpush1.msra.mxu0 0.0
        %668 = vmatprep.subr.mxu0 0.0
        %669 = vmatpush1.msra.mxu0 0.0
        %670 = vmatprep.subr.mxu0 0.0
        %671 = vmatpush1.msra.mxu0 0.0
        %672 = vmatprep.subr.mxu0 0.0
        %673 = vmatpush1.msra.mxu0 0.0
        %674 = vmatprep.subr.mxu0 0.0
        %675 = vmatpush1.msra.mxu0 0.0
        %676 = vmatprep.subr.mxu0 0.0
        %677 = vmatpush1.msra.mxu0 0.0
        %678 = vmatprep.subr.mxu0 0.0
        %679 = vmatpush1.msra.mxu0 0.0
        %680 = vmatprep.subr.mxu0 0.0
        %681 = vmatpush1.msra.mxu0 0.0
        %682 = vmatprep.subr.mxu0 0.0
        %683 = vmatpush1.msra.mxu0 0.0
        %684 = vmatprep.subr.mxu0 0.0
        %685 = vmatpush1.msra.mxu0 0.0
        %686 = vmatprep.subr.mxu0 0.0
        %687 = vmatpush1.msra.mxu0 0.0
        %688 = vmatprep.subr.mxu0 0.0
        %689 = vmatpush1.msra.mxu0 0.0
        %690 = vmatprep.subr.mxu0 0.0
        %691 = vmatpush1.msra.mxu0 0.0
        %692 = vmatprep.subr.mxu0 0.0
        %693 = vmatpush1.msra.mxu0 0.0
        %694 = vmatprep.subr.mxu0 0.0
        %695 = vmatpush1.msra.mxu0 0.0
        %696 = vmatprep.subr.mxu0 0.0
        %697 = vmatpush1.msra.mxu0 0.0
        %698 = vmatprep.subr.mxu0 0.0
        %699 = vmatpush1.msra.mxu0 0.0
        %700 = vmatprep.mubr.f32.mxu0 0.0
        %701 = vmatmul.mubr.f32.gmra.mrb[0].mxu0 %v631
        %v702 = vpop.f32.mrb[0].mxu0
        %v703 = vadd.f32 %v511, %v702
        %v704 = vpop.f32.mrb[0].mxu0
        %705 = vmatprep.mubr.f32.mxu0 0.0
        %706 = vmatmul.mubr.f32.gmra.mrb[0].mxu0 %v634
        %v707 = vpop.f32.mrb[0].mxu0
        %v708 = vadd.f32 %v512, %v707
        %v709 = vpop.f32.mrb[0].mxu0
        %710 = vdwg.mxu0
        %s711 = scalar_lea.vmem %s251, 32 [#allocation2]
        %v712 = vld [vmem:[%s711] sm:$0xff]
        %v713 = vld [vmem:[%s711 + $0x8] sm:$0xff]
        %s714 = scalar_lea.vmem %s260, 32 [#allocation5]
        %v715 = vld [vmem:[%s714] sm:$0xff]
        %v716 = vld [vmem:[%s714 + $0x8] sm:$0xff]
        %s717 = scalar_lea.vmem %s269, 32 [#allocation7]
        %v718 = vld [vmem:[%s717] sm:$0xff]
        %v719 = vld [vmem:[%s717 + $0x8] sm:$0xff]
        %v720 = vmul.f32 %v712, 0.17677669
        %v721 = vmul.f32 %v713, 0.17677669
        %v723 = vsel %vm318, %v720, 0
        %v726 = vsel %vm318, %v721, 0
        %v729 = vsel %vm318, %v715, 0
        %v732 = vsel %vm318, %v716, 0
        %734 = vmatprep.subr.mxu0 0.0
        %735 = vmatpush1.xpose.msra.mxu0 %v729
        %736 = vmatprep.subr.mxu0 0.0
        %737 = vmatpush1.xpose.msra.mxu0 %v732
        %738 = vmatprep.subr.mxu0 0.0
        %739 = vmatpush1.xpose.msra.mxu0 0.0
        %740 = vmatprep.subr.mxu0 0.0
        %741 = vmatpush1.xpose.msra.mxu0 0.0
        %742 = vmatprep.subr.mxu0 0.0
        %743 = vmatpush1.xpose.msra.mxu0 0.0
        %744 = vmatprep.subr.mxu0 0.0
        %745 = vmatpush1.xpose.msra.mxu0 0.0
        %746 = vmatprep.subr.mxu0 0.0
        %747 = vmatpush1.xpose.msra.mxu0 0.0
        %748 = vmatprep.subr.mxu0 0.0
        %749 = vmatpush1.xpose.msra.mxu0 0.0
        %750 = vmatprep.subr.mxu0 0.0
        %751 = vmatpush1.xpose.msra.mxu0 0.0
        %752 = vmatprep.subr.mxu0 0.0
        %753 = vmatpush1.xpose.msra.mxu0 0.0
        %754 = vmatprep.subr.mxu0 0.0
        %755 = vmatpush1.xpose.msra.mxu0 0.0
        %756 = vmatprep.subr.mxu0 0.0
        %757 = vmatpush1.xpose.msra.mxu0 0.0
        %758 = vmatprep.subr.mxu0 0.0
        %759 = vmatpush1.xpose.msra.mxu0 0.0
        %760 = vmatprep.subr.mxu0 0.0
        %761 = vmatpush1.xpose.msra.mxu0 0.0
        %762 = vmatprep.subr.mxu0 0.0
        %763 = vmatpush1.xpose.msra.mxu0 0.0
        %764 = vmatprep.subr.mxu0 0.0
        %765 = vmatpush1.xpose.msra.mxu0 0.0
        %766 = vmatprep.subr.mxu0 0.0
        %767 = vmatpush1.xpose.msra.mxu0 0.0
        %768 = vmatprep.subr.mxu0 0.0
        %769 = vmatpush1.xpose.msra.mxu0 0.0
        %770 = vmatprep.subr.mxu0 0.0
        %771 = vmatpush1.xpose.msra.mxu0 0.0
        %772 = vmatprep.subr.mxu0 0.0
        %773 = vmatpush1.xpose.msra.mxu0 0.0
        %774 = vmatprep.subr.mxu0 0.0
        %775 = vmatpush1.xpose.msra.mxu0 0.0
        %776 = vmatprep.subr.mxu0 0.0
        %777 = vmatpush1.xpose.msra.mxu0 0.0
        %778 = vmatprep.subr.mxu0 0.0
        %779 = vmatpush1.xpose.msra.mxu0 0.0
        %780 = vmatprep.subr.mxu0 0.0
        %781 = vmatpush1.xpose.msra.mxu0 0.0
        %782 = vmatprep.subr.mxu0 0.0
        %783 = vmatpush1.xpose.msra.mxu0 0.0
        %784 = vmatprep.subr.mxu0 0.0
        %785 = vmatpush1.xpose.msra.mxu0 0.0
        %786 = vmatprep.subr.mxu0 0.0
        %787 = vmatpush1.xpose.msra.mxu0 0.0
        %788 = vmatprep.subr.mxu0 0.0
        %789 = vmatpush1.xpose.msra.mxu0 0.0
        %790 = vmatprep.subr.mxu0 0.0
        %791 = vmatpush1.xpose.msra.mxu0 0.0
        %792 = vmatprep.subr.mxu0 0.0
        %793 = vmatpush1.xpose.msra.mxu0 0.0
        %794 = vmatprep.subr.mxu0 0.0
        %795 = vmatpush1.xpose.msra.mxu0 0.0
        %796 = vmatprep.subr.mxu0 0.0
        %797 = vmatpush1.xpose.msra.mxu0 0.0
        %798 = vmatprep.mubr.f32.mxu0 0.0
        %799 = vmatmul.mubr.f32.gmra.mrb[0].mxu0 %v723
        %v800 = vpop.f32.mrb[0].mxu0
        %v801 = vadd.f32 %v316, %v800
        %v802 = vpop.f32.mrb[0].mxu0
        %803 = vmatprep.mubr.f32.mxu0 0.0
        %804 = vmatmul.mubr.f32.gmra.mrb[0].mxu0 %v726
        %v805 = vpop.f32.mrb[0].mxu0
        %v806 = vadd.f32 %v317, %v805
        %v807 = vpop.f32.mrb[0].mxu0
        %808 = vdwg.mxu0
        %v809 = vsel %vm406, %v801, -inf
        %810 = vmax.xlane.f32.xlu0 %v809
        %v811 = vpop.xlane.xlu0 %810
        %v812 = vsel %vm406, %v806, -inf
        %813 = vmax.xlane.f32.xlu0 %v812
        %v814 = vpop.xlane.xlu0 %813
        %v815 = vsub.f32 %v801, %v811
        %v816 = vsub.f32 %v806, %v814
        %v817 = vmul.f32 %v815, 1.442695
        %v818 = vpow.pop %v817
        %v819 = vmul.f32 %v816, 1.442695
        %v820 = vpow.pop %v819
        %v821 = vsel %vm406, %v818, 0.0
        %822 = vadd.xlane.f32.xlu0 %v821
        %v823 = vpop.xlane.xlu0 %822
        %v824 = vsel %vm406, %v820, 0.0
        %825 = vadd.xlane.f32.xlu0 %v824
        %v826 = vpop.xlane.xlu0 %825
        %v827 = vrcp.pop %v823
        %v828 = vrcp.pop %v826
        %v829 = vmul.f32 %v818, %v827
        %v830 = vmul.f32 %v820, %v828
        %v832 = vsel %vm406, %v829, 0
        %v835 = vsel %vm406, %v830, 0
        %837 = vmatprep.subr.mxu0 0.0
        %838 = vmatpush1.msra.mxu0 %v718
        %839 = vmatprep.subr.mxu0 0.0
        %840 = vmatpush1.msra.mxu0 %v719
        %841 = vmatprep.subr.mxu0 0.0
        %842 = vmatpush1.msra.mxu0 0.0
        %843 = vmatprep.subr.mxu0 0.0
        %844 = vmatpush1.msra.mxu0 0.0
        %845 = vmatprep.subr.mxu0 0.0
        %846 = vmatpush1.msra.mxu0 0.0
        %847 = vmatprep.subr.mxu0 0.0
        %848 = vmatpush1.msra.mxu0 0.0
        %849 = vmatprep.subr.mxu0 0.0
        %850 = vmatpush1.msra.mxu0 0.0
        %851 = vmatprep.subr.mxu0 0.0
        %852 = vmatpush1.msra.mxu0 0.0
        %853 = vmatprep.subr.mxu0 0.0
        %854 = vmatpush1.msra.mxu0 0.0
        %855 = vmatprep.subr.mxu0 0.0
        %856 = vmatpush1.msra.mxu0 0.0
        %857 = vmatprep.subr.mxu0 0.0
        %858 = vmatpush1.msra.mxu0 0.0
        %859 = vmatprep.subr.mxu0 0.0
        %860 = vmatpush1.msra.mxu0 0.0
        %861 = vmatprep.subr.mxu0 0.0
        %862 = vmatpush1.msra.mxu0 0.0
        %863 = vmatprep.subr.mxu0 0.0
        %864 = vmatpush1.msra.mxu0 0.0
        %865 = vmatprep.subr.mxu0 0.0
        %866 = vmatpush1.msra.mxu0 0.0
        %867 = vmatprep.subr.mxu0 0.0
        %868 = vmatpush1.msra.mxu0 0.0
        %869 = vmatprep.subr.mxu0 0.0
        %870 = vmatpush1.msra.mxu0 0.0
        %871 = vmatprep.subr.mxu0 0.0
        %872 = vmatpush1.msra.mxu0 0.0
        %873 = vmatprep.subr.mxu0 0.0
        %874 = vmatpush1.msra.mxu0 0.0
        %875 = vmatprep.subr.mxu0 0.0
        %876 = vmatpush1.msra.mxu0 0.0
        %877 = vmatprep.subr.mxu0 0.0
        %878 = vmatpush1.msra.mxu0 0.0
        %879 = vmatprep.subr.mxu0 0.0
        %880 = vmatpush1.msra.mxu0 0.0
        %881 = vmatprep.subr.mxu0 0.0
        %882 = vmatpush1.msra.mxu0 0.0
        %883 = vmatprep.subr.mxu0 0.0
        %884 = vmatpush1.msra.mxu0 0.0
        %885 = vmatprep.subr.mxu0 0.0
        %886 = vmatpush1.msra.mxu0 0.0
        %887 = vmatprep.subr.mxu0 0.0
        %888 = vmatpush1.msra.mxu0 0.0
        %889 = vmatprep.subr.mxu0 0.0
        %890 = vmatpush1.msra.mxu0 0.0
        %891 = vmatprep.subr.mxu0 0.0
        %892 = vmatpush1.msra.mxu0 0.0
        %893 = vmatprep.subr.mxu0 0.0
        %894 = vmatpush1.msra.mxu0 0.0
        %895 = vmatprep.subr.mxu0 0.0
        %896 = vmatpush1.msra.mxu0 0.0
        %897 = vmatprep.subr.mxu0 0.0
        %898 = vmatpush1.msra.mxu0 0.0
        %899 = vmatprep.subr.mxu0 0.0
        %900 = vmatpush1.msra.mxu0 0.0
        %901 = vmatprep.mubr.f32.mxu0 0.0
        %902 = vmatmul.mubr.f32.gmra.mrb[0].mxu0 %v832
        %v903 = vpop.f32.mrb[0].mxu0
        %v904 = vadd.f32 %v712, %v903
        %v905 = vpop.f32.mrb[0].mxu0
        %906 = vmatprep.mubr.f32.mxu0 0.0
        %907 = vmatmul.mubr.f32.gmra.mrb[0].mxu0 %v835
        %v908 = vpop.f32.mrb[0].mxu0
        %v909 = vadd.f32 %v713, %v908
        %v910 = vpop.f32.mrb[0].mxu0
        %911 = vdwg.mxu0
        %s912 = scalar_lea.vmem %s251, 48 [#allocation2]
        %v913 = vld [vmem:[%s912] sm:$0xff]
        %v914 = vld [vmem:[%s912 + $0x8] sm:$0xff]
        %s915 = scalar_lea.vmem %s260, 48 [#allocation5]
        %v916 = vld [vmem:[%s915] sm:$0xff]
        %v917 = vld [vmem:[%s915 + $0x8] sm:$0xff]
        %s918 = scalar_lea.vmem %s269, 48 [#allocation7]
        %v919 = vld [vmem:[%s918] sm:$0xff]
        %v920 = vld [vmem:[%s918 + $0x8] sm:$0xff]
        %v921 = vmul.f32 %v913, 0.17677669
        %v922 = vmul.f32 %v914, 0.17677669
        %v924 = vsel %vm318, %v921, 0
        %v927 = vsel %vm318, %v922, 0
        %v930 = vsel %vm318, %v916, 0
        %v933 = vsel %vm318, %v917, 0
        %935 = vmatprep.subr.mxu0 0.0
        %936 = vmatpush1.xpose.msra.mxu0 %v930
        %937 = vmatprep.subr.mxu0 0.0
        %938 = vmatpush1.xpose.msra.mxu0 %v933
        %939 = vmatprep.subr.mxu0 0.0
        %940 = vmatpush1.xpose.msra.mxu0 0.0
        %941 = vmatprep.subr.mxu0 0.0
        %942 = vmatpush1.xpose.msra.mxu0 0.0
        %943 = vmatprep.subr.mxu0 0.0
        %944 = vmatpush1.xpose.msra.mxu0 0.0
        %945 = vmatprep.subr.mxu0 0.0
        %946 = vmatpush1.xpose.msra.mxu0 0.0
        %947 = vmatprep.subr.mxu0 0.0
        %948 = vmatpush1.xpose.msra.mxu0 0.0
        %949 = vmatprep.subr.mxu0 0.0
        %950 = vmatpush1.xpose.msra.mxu0 0.0
        %951 = vmatprep.subr.mxu0 0.0
        %952 = vmatpush1.xpose.msra.mxu0 0.0
        %953 = vmatprep.subr.mxu0 0.0
        %954 = vmatpush1.xpose.msra.mxu0 0.0
        %955 = vmatprep.subr.mxu0 0.0
        %956 = vmatpush1.xpose.msra.mxu0 0.0
        %957 = vmatprep.subr.mxu0 0.0
        %958 = vmatpush1.xpose.msra.mxu0 0.0
        %959 = vmatprep.subr.mxu0 0.0
        %960 = vmatpush1.xpose.msra.mxu0 0.0
        %961 = vmatprep.subr.mxu0 0.0
        %962 = vmatpush1.xpose.msra.mxu0 0.0
        %963 = vmatprep.subr.mxu0 0.0
        %964 = vmatpush1.xpose.msra.mxu0 0.0
        %965 = vmatprep.subr.mxu0 0.0
        %966 = vmatpush1.xpose.msra.mxu0 0.0
        %967 = vmatprep.subr.mxu0 0.0
        %968 = vmatpush1.xpose.msra.mxu0 0.0
        %969 = vmatprep.subr.mxu0 0.0
        %970 = vmatpush1.xpose.msra.mxu0 0.0
        %971 = vmatprep.subr.mxu0 0.0
        %972 = vmatpush1.xpose.msra.mxu0 0.0
        %973 = vmatprep.subr.mxu0 0.0
        %974 = vmatpush1.xpose.msra.mxu0 0.0
        %975 = vmatprep.subr.mxu0 0.0
        %976 = vmatpush1.xpose.msra.mxu0 0.0
        %977 = vmatprep.subr.mxu0 0.0
        %978 = vmatpush1.xpose.msra.mxu0 0.0
        %979 = vmatprep.subr.mxu0 0.0
        %980 = vmatpush1.xpose.msra.mxu0 0.0
        %981 = vmatprep.subr.mxu0 0.0
        %982 = vmatpush1.xpose.msra.mxu0 0.0
        %983 = vmatprep.subr.mxu0 0.0
        %984 = vmatpush1.xpose.msra.mxu0 0.0
        %985 = vmatprep.subr.mxu0 0.0
        %986 = vmatpush1.xpose.msra.mxu0 0.0
        %987 = vmatprep.subr.mxu0 0.0
        %988 = vmatpush1.xpose.msra.mxu0 0.0
        %989 = vmatprep.subr.mxu0 0.0
        %990 = vmatpush1.xpose.msra.mxu0 0.0
        %991 = vmatprep.subr.mxu0 0.0
        %992 = vmatpush1.xpose.msra.mxu0 0.0
        %993 = vmatprep.subr.mxu0 0.0
        %994 = vmatpush1.xpose.msra.mxu0 0.0
        %995 = vmatprep.subr.mxu0 0.0
        %996 = vmatpush1.xpose.msra.mxu0 0.0
        %997 = vmatprep.subr.mxu0 0.0
        %998 = vmatpush1.xpose.msra.mxu0 0.0
        %999 = vmatprep.mubr.f32.mxu0 0.0
        %1000 = vmatmul.mubr.f32.gmra.mrb[0].mxu0 %v924
        %v1001 = vpop.f32.mrb[0].mxu0
        %v1002 = vadd.f32 %v316, %v1001
        %v1003 = vpop.f32.mrb[0].mxu0
        %1004 = vmatprep.mubr.f32.mxu0 0.0
        %1005 = vmatmul.mubr.f32.gmra.mrb[0].mxu0 %v927
        %v1006 = vpop.f32.mrb[0].mxu0
        %v1007 = vadd.f32 %v317, %v1006
        %v1008 = vpop.f32.mrb[0].mxu0
        %1009 = vdwg.mxu0
        %v1010 = vsel %vm406, %v1002, -inf
        %1011 = vmax.xlane.f32.xlu0 %v1010
        %v1012 = vpop.xlane.xlu0 %1011
        %v1013 = vsel %vm406, %v1007, -inf
        %1014 = vmax.xlane.f32.xlu0 %v1013
        %v1015 = vpop.xlane.xlu0 %1014
        %v1016 = vsub.f32 %v1002, %v1012
        %v1017 = vsub.f32 %v1007, %v1015
        %v1018 = vmul.f32 %v1016, 1.442695
        %v1019 = vpow.pop %v1018
        %v1020 = vmul.f32 %v1017, 1.442695
        %v1021 = vpow.pop %v1020
        %v1022 = vsel %vm406, %v1019, 0.0
        %1023 = vadd.xlane.f32.xlu0 %v1022
        %v1024 = vpop.xlane.xlu0 %1023
        %v1025 = vsel %vm406, %v1021, 0.0
        %1026 = vadd.xlane.f32.xlu0 %v1025
        %v1027 = vpop.xlane.xlu0 %1026
        %v1028 = vrcp.pop %v1024
        %v1029 = vrcp.pop %v1027
        %v1030 = vmul.f32 %v1019, %v1028
        %v1031 = vmul.f32 %v1021, %v1029
        %v1033 = vsel %vm406, %v1030, 0
        %v1036 = vsel %vm406, %v1031, 0
        %1038 = vmatprep.subr.mxu0 0.0
        %1039 = vmatpush1.msra.mxu0 %v919
        %1040 = vmatprep.subr.mxu0 0.0
        %1041 = vmatpush1.msra.mxu0 %v920
        %1042 = vmatprep.subr.mxu0 0.0
        %1043 = vmatpush1.msra.mxu0 0.0
        %1044 = vmatprep.subr.mxu0 0.0
        %1045 = vmatpush1.msra.mxu0 0.0
        %1046 = vmatprep.subr.mxu0 0.0
        %1047 = vmatpush1.msra.mxu0 0.0
        %1048 = vmatprep.subr.mxu0 0.0
        %1049 = vmatpush1.msra.mxu0 0.0
        %1050 = vmatprep.subr.mxu0 0.0
        %1051 = vmatpush1.msra.mxu0 0.0
        %1052 = vmatprep.subr.mxu0 0.0
        %1053 = vmatpush1.msra.mxu0 0.0
        %1054 = vmatprep.subr.mxu0 0.0
        %1055 = vmatpush1.msra.mxu0 0.0
        %1056 = vmatprep.subr.mxu0 0.0
        %1057 = vmatpush1.msra.mxu0 0.0
        %1058 = vmatprep.subr.mxu0 0.0
        %1059 = vmatpush1.msra.mxu0 0.0
        %1060 = vmatprep.subr.mxu0 0.0
        %1061 = vmatpush1.msra.mxu0 0.0
        %1062 = vmatprep.subr.mxu0 0.0
        %1063 = vmatpush1.msra.mxu0 0.0
        %1064 = vmatprep.subr.mxu0 0.0
        %1065 = vmatpush1.msra.mxu0 0.0
        %1066 = vmatprep.subr.mxu0 0.0
        %1067 = vmatpush1.msra.mxu0 0.0
        %1068 = vmatprep.subr.mxu0 0.0
        %1069 = vmatpush1.msra.mxu0 0.0
        %1070 = vmatprep.subr.mxu0 0.0
        %1071 = vmatpush1.msra.mxu0 0.0
        %1072 = vmatprep.subr.mxu0 0.0
        %1073 = vmatpush1.msra.mxu0 0.0
        %1074 = vmatprep.subr.mxu0 0.0
        %1075 = vmatpush1.msra.mxu0 0.0
        %1076 = vmatprep.subr.mxu0 0.0
        %1077 = vmatpush1.msra.mxu0 0.0
        %1078 = vmatprep.subr.mxu0 0.0
        %1079 = vmatpush1.msra.mxu0 0.0
        %1080 = vmatprep.subr.mxu0 0.0
        %1081 = vmatpush1.msra.mxu0 0.0
        %1082 = vmatprep.subr.mxu0 0.0
        %1083 = vmatpush1.msra.mxu0 0.0
        %1084 = vmatprep.subr.mxu0 0.0
        %1085 = vmatpush1.msra.mxu0 0.0
        %1086 = vmatprep.subr.mxu0 0.0
        %1087 = vmatpush1.msra.mxu0 0.0
        %1088 = vmatprep.subr.mxu0 0.0
        %1089 = vmatpush1.msra.mxu0 0.0
        %1090 = vmatprep.subr.mxu0 0.0
        %1091 = vmatpush1.msra.mxu0 0.0
        %1092 = vmatprep.subr.mxu0 0.0
        %1093 = vmatpush1.msra.mxu0 0.0
        %1094 = vmatprep.subr.mxu0 0.0
        %1095 = vmatpush1.msra.mxu0 0.0
        %1096 = vmatprep.subr.mxu0 0.0
        %1097 = vmatpush1.msra.mxu0 0.0
        %1098 = vmatprep.subr.mxu0 0.0
        %1099 = vmatpush1.msra.mxu0 0.0
        %1100 = vmatprep.subr.mxu0 0.0
        %1101 = vmatpush1.msra.mxu0 0.0
        %1102 = vmatprep.mubr.f32.mxu0 0.0
        %1103 = vmatmul.mubr.f32.gmra.mrb[0].mxu0 %v1033
        %v1104 = vpop.f32.mrb[0].mxu0
        %v1105 = vadd.f32 %v913, %v1104
        %v1106 = vpop.f32.mrb[0].mxu0
        %1107 = vmatprep.mubr.f32.mxu0 0.0
        %1108 = vmatmul.mubr.f32.gmra.mrb[0].mxu0 %v1036
        %v1109 = vpop.f32.mrb[0].mxu0
        %v1110 = vadd.f32 %v914, %v1109
        %v1111 = vpop.f32.mrb[0].mxu0
        %1112 = vdwg.mxu0
        %1115 = vrot.lane.b32.xlu0 %v703, 32
        %v1116 = vpop.permute.xlu0 %1115
        %1117 = vrot.lane.b32.xlu0 %v708, 32
        %v1118 = vpop.permute.xlu0 %1117
        %1123 = vrot.lane.b32.xlu0 %v904, 64
        %v1124 = vpop.permute.xlu0 %1123
        %1125 = vrot.lane.b32.xlu0 %v909, 64
        %v1126 = vpop.permute.xlu0 %1125
        %1131 = vrot.lane.b32.xlu0 %v1105, 96
        %v1132 = vpop.permute.xlu0 %1131
        %1133 = vrot.lane.b32.xlu0 %v1110, 96
        %v1134 = vpop.permute.xlu0 %1133
        %v1137 = vsel %vm318, %v502, %v1116
        %v1138 = vsel %vm318, %v507, %v1118
        %vm1139 = vcmask 523264
        %v1140 = vsel %vm1139, %v1137, %v1124
        %v1141 = vsel %vm1139, %v1138, %v1126
        %vm1142 = vcmask 785408
        %v1143 = vsel %vm1142, %v1140, %v1132
        %v1144 = vsel %vm1142, %v1141, %v1134
        %1145 = vst [vmem:[%s307] sm:$0xff] %v1143
        %1146 = vst [vmem:[%s307 + $0x8] sm:$0xff] %v1144
        %s1147 = sand.u32 %s132, 1
        %s1148 = scalar_lea.sflag [#allocation4], %s1147
        %s1149 = sand.u32 %s132, 1
        %s1150 = smul.addr %s1149, 16
        %s1151 = scalar_lea.vmem [#allocation10], %s1150
        // Predicated region
        $region53: #{tpu_custom_call.1} parent=35 // pred_check
          %p1152 = pneg %p142
        $region54: #{tpu_custom_call.1} parent=35 // pred_check_branch
          %1154 = sbr.rel (%p1152) target = $region56
        $region55: #{tpu_custom_call.1} parent=35 // pred_region
          %s1156 = ssub.s32 256, 256
          %1157 = vsyncadd %s1148, %s1156
          %s1158 = smul.addr %s25, 2
          %s1159 = smul.addr %s1158, 128
          %s1160 = scalar_lea.hbm %s4, %s1159
          %s1161 = sshll.u32 %s1151, 4
          %s1162 = int_to_ptr.vmem [resolvable:$true] %s1161
          %1167 = dma.vmem_to_hbm [thread:$0]  %s1162, 256, %s1160, %s1148, 128, 128, 8
        $region56: #{tpu_custom_call.1} parent=35 // pred_fallthru
          _
      $region36: #{tpu_custom_call.1} parent=5 // pred_fallthru
        _
      %p1168 = scmp.le.s32.totalorder 2, %s20
      // Predicated region
      $region57: #{tpu_custom_call.1} parent=5 // pred_check
        %p1169 = pneg %p1168
      $region58: #{tpu_custom_call.1} parent=5 // pred_check_branch
        %1171 = sbr.rel (%p1169) target = $region60
      $region59: #{tpu_custom_call.1} parent=5 // pred_region
        %s1172 = ssub.s32 %s20, 2
        // Predicated region
        $region61: #{tpu_custom_call.1} parent=59 // pred_check
          %p1173 = pneg %p148
        $region62: #{tpu_custom_call.1} parent=59 // pred_check_branch
          %1175 = sbr.rel (%p1173) target = $region64
        $region63: #{tpu_custom_call.1} parent=59 // pred_region
          %s1176 = sand.u32 %s133, 1
          %s1177 = scalar_lea.sflag [#allocation4], %s1176
          %s1178 = sand.u32 %s133, 1
          %s1179 = smul.addr %s1178, 16
          %s1180 = scalar_lea.vmem [#allocation10], %s1179
          %1181 = dma.done %s1177, 256
        $region64: #{tpu_custom_call.1} parent=59 // pred_fallthru
          _
      $region60: #{tpu_custom_call.1} parent=5 // pred_fallthru
        _
    $region6: #{tpu_custom_call.1} parent=1 // loop_footer
      %s24 = sadd.s32 1, %s20
    $region7: #{tpu_custom_call.1} parent=1 // loop_footer_branch
      %19 = sbr.rel target = $region3
    $region8: #{tpu_custom_call.1} parent=1 // loop_exit
      _
    %1182 = vsyncpa [#allocation3], 1
    %s1183 = scalar_lea.sflag [#allocation3], 1
    %1184 = vsyncpa %s1183, 1
    %1185 = vsyncpa [#allocation6], 1
    %s1186 = scalar_lea.sflag [#allocation6], 1
    %1187 = vsyncpa %s1186, 1
    %1188 = vsyncpa [#allocation9], 1
    %1189 = vsyncpa [#allocation4], 1
    %s1190 = scalar_lea.sflag [#allocation4], 1
    %1191 = vsyncpa %s1190, 1

</llo_original>
